<compile_context>
chip_gen: v6e
topology: v6e:2x2x1
jax: 0.10.0
libtpu: 0.0.40
codegen_flags: <defaults>
</compile_context>

<pallas_src>
import jax
import jax.numpy as jnp
from jax import lax
from jax.experimental import pallas as pl
from jax.experimental.pallas import tpu as pltpu


def _round_up(a: int, b: int) -> int:
    return ((a + b - 1) // b) * b


def _patch_embed_kernel(p_ref, w_ref, b_ref, o_ref):
    # p_ref: (tm, Kp), w_ref: (Kp, Dp), b_ref: (1, Dp) f32, o_ref: (tm, Dp)
    acc = jnp.dot(p_ref[...], w_ref[...], preferred_element_type=jnp.float32)
    o_ref[...] = (acc + b_ref[...]).astype(o_ref.dtype)


def vit_embedding(x, weight, bias, patch_size, *, tm=512, compute_dtype=None):
    """ViT patch embedding (Conv2d w/ stride == kernel, then flatten+transpose).

    x:       (B, C, H, W)   NCHW image batch.
    weight:  (D, C, P, P)   PyTorch nn.Conv2d weight layout.
    bias:    (D,)
    tm:      M tile (patch rows per grid step).  Use a multiple of 128
             (256 on v6e/v7x); automatically clamped for small problems.
    compute_dtype: matmul operand dtype (e.g. jnp.bfloat16 for the bf16-native
             MXUs).  Accumulation is always f32; output keeps x.dtype.
    """
    B, C, H, W = x.shape
    D = weight.shape[0]
    P = int(patch_size)
    assert H % P == 0 and W % P == 0, "image size must be divisible by patch size"
    nh, nw = H // P, W // P
    N = nh * nw
    K = C * P * P
    M = B * N

    cdt = jnp.dtype(compute_dtype) if compute_dtype is not None else jnp.dtype(x.dtype)
    out_dtype = x.dtype

    # Lane-align the contraction and output-feature dims (128 lanes).
    Kp = _round_up(K, 128)
    Dp = _round_up(D, 128)

    # M tiling: pad M to a multiple of the effective tile.
    tm = _round_up(max(int(tm), 8), 8)
    tm_eff = min(tm, _round_up(M, 8))
    M_pad = _round_up(M, tm_eff)
    grid_m = M_pad // tm_eff

    # --- glue (XLA): patch extraction, flatten in (c, ph, pw) order ---
    # (B, C, nh, P, nw, P) -> (B, nh, nw, C, P, P) -> (B*N, K)
    patches = x.reshape(B, C, nh, P, nw, P)
    patches = jnp.transpose(patches, (0, 2, 4, 1, 3, 5)).reshape(M, K)
    patches = patches.astype(cdt)
    if (M_pad - M) or (Kp - K):
        patches = jnp.pad(patches, ((0, M_pad - M), (0, Kp - K)))

    # conv weight (D, C, P, P) -> matmul weight (Kp, Dp); bias (1, Dp) in f32.
    w_mat = weight.reshape(D, K).T.astype(cdt)
    if (Kp - K) or (Dp - D):
        w_mat = jnp.pad(w_mat, ((0, Kp - K), (0, Dp - D)))
    b_mat = bias.astype(jnp.float32).reshape(1, D)
    if Dp - D:
        b_mat = jnp.pad(b_mat, ((0, 0), (0, Dp - D)))

    in_isz = cdt.itemsize
    out_isz = jnp.dtype(out_dtype).itemsize

    # VMEM budget: double-buffered patches + output, weight (<=2 bufs), bias.
    vmem_needed = (2 * tm_eff * Kp * in_isz
                   + 2 * tm_eff * Dp * out_isz
                   + 2 * Kp * Dp * in_isz
                   + 2 * Dp * 4)
    vmem_limit = max(32 * 1024 * 1024, int(1.5 * vmem_needed))

    cost = pl.CostEstimate(
        flops=2 * M_pad * Kp * Dp,
        bytes_accessed=(M_pad * Kp * in_isz + Kp * Dp * in_isz
                        + Dp * 4 + M_pad * Dp * out_isz),
        transcendentals=0,
    )

    def _run(const_spec_kwargs):
        grid_spec = pltpu.PrefetchScalarGridSpec(
            num_scalar_prefetch=0,
            grid=(grid_m,),
            in_specs=[
                pl.BlockSpec((tm_eff, Kp), lambda i: (i, 0)),
                pl.BlockSpec((Kp, Dp), lambda i: (0, 0), **const_spec_kwargs),
                pl.BlockSpec((1, Dp), lambda i: (0, 0), **const_spec_kwargs),
            ],
            out_specs=pl.BlockSpec((tm_eff, Dp), lambda i: (i, 0)),
        )
        return pl.pallas_call(
            _patch_embed_kernel,
            out_shape=jax.ShapeDtypeStruct((M_pad, Dp), out_dtype),
            grid_spec=grid_spec,
            compiler_params=pltpu.CompilerParams(
                dimension_semantics=("parallel",),
                vmem_limit_bytes=vmem_limit,
            ),
            cost_estimate=cost,
        )(patches, w_mat, b_mat)

    # Weight/bias blocks are grid-invariant (index_map always (0, 0)):
    # single-buffer them when the installed JAX supports pipeline_mode.
    if hasattr(pl, "Buffered"):
        try:
            out_flat = _run({"pipeline_mode": pl.Buffered(1)})
        except Exception:
            out_flat = _run({})
    else:
        out_flat = _run({})

    return out_flat[:M, :D].reshape(B, N, D)


if __name__ == "__main__":
    # Small shapes consistent with the module: img_size=16, patch_size=4,
    # in_chans=4, embed_dim=32, batch=2 -> num_patches = 16.
    B, C, H, W = 2, 4, 16, 16
    P, D = 4, 32

    key = jax.random.PRNGKey(0)
    kx, kw, kb = jax.random.split(key, 3)
    x = jax.random.normal(kx, (B, C, H, W), dtype=jnp.float32)
    # Deterministic synthetic parameters (shapes match nn.Conv2d(C, D, P, stride=P)).
    weight = jax.random.normal(kw, (D, C, P, P), dtype=jnp.float32) * 0.02
    bias = jax.random.normal(kb, (D,), dtype=jnp.float32) * 0.02

    out = vit_embedding(x, weight, bias, P)
    jax.block_until_ready(out)

    # Reference: plain-JAX conv with the same semantics as nn.Conv2d.
    ref = lax.conv_general_dilated(
        x, weight, window_strides=(P, P), padding="VALID",
        dimension_numbers=("NCHW", "OIHW", "NCHW"))
    ref = ref + bias[None, :, None, None]
    ref = ref.reshape(B, D, -1).transpose(0, 2, 1)  # flatten(2).transpose(1,2)

    assert out.shape == (B, (H // P) * (W // P), D)
    assert jnp.allclose(out, ref, atol=1e-4, rtol=1e-4), "f32 path mismatch"

    # bf16-operand path (f32 accumulation) for the bf16-native MXUs.
    out_bf16 = vit_embedding(x, weight, bias, P, compute_dtype=jnp.bfloat16)
    jax.block_until_ready(out_bf16)
    assert out_bf16.shape == out.shape
    assert jnp.allclose(out_bf16, ref, atol=5e-2, rtol=5e-2), "bf16 path mismatch"

    print("KERNEL_OK")
</pallas_src>

<mosaic_0001>
module attributes {stable_mosaic.version = 11 : i64} {
  func.func @_patch_embed_kernel(%arg0: i32, %arg1: memref<32x128xf32, #tpu.memory_space<vmem>>, %arg2: memref<128x128xf32, #tpu.memory_space<vmem>>, %arg3: memref<1x128xf32, #tpu.memory_space<vmem>>, %arg4: memref<32x128xf32, #tpu.memory_space<vmem>>) attributes {dimension_semantics = [#tpu.dimension_semantics<parallel>], iteration_bounds = array<i64: 1>, scalar_prefetch = 0 : i64, scratch_operands = 0 : i64, tpu.core_type = #tpu.core_type<tc>, window_params = [{transform_indices = @transform_0, window_bounds = array<i64: 32, 128>}, {pipeline_mode = #tpu.pipeline_mode<synchronous>, transform_indices = @transform_1, window_bounds = array<i64: 128, 128>}, {pipeline_mode = #tpu.pipeline_mode<synchronous>, transform_indices = @transform_2, window_bounds = array<i64: 1, 128>}, {transform_indices = @transform_3, window_bounds = array<i64: 32, 128>}]} {
    %c0 = arith.constant 0 : index
    %c0_0 = arith.constant 0 : index
    %0 = vector.load %arg1[%c0, %c0_0] : memref<32x128xf32, #tpu.memory_space<vmem>>, vector<32x128xf32>
    %c0_1 = arith.constant 0 : index
    %c0_2 = arith.constant 0 : index
    %1 = vector.load %arg2[%c0_1, %c0_2] : memref<128x128xf32, #tpu.memory_space<vmem>>, vector<128x128xf32>
    %cst = arith.constant dense<0.000000e+00> : vector<32x128xf32>
    %2 = tpu.matmul %0, %1, %cst {dimension_numbers = #tpu.dot_dimension_numbers<[1], [0], [0], [1], [0, 0, 1, 1], [], []>} : vector<32x128xf32>, vector<128x128xf32>, vector<32x128xf32> -> vector<32x128xf32>
    %c0_3 = arith.constant 0 : index
    %c0_4 = arith.constant 0 : index
    %3 = vector.load %arg3[%c0_3, %c0_4] : memref<1x128xf32, #tpu.memory_space<vmem>>, vector<1x128xf32>
    %4 = vector.broadcast %3 : vector<1x128xf32> to vector<32x128xf32>
    %5 = arith.addf %2, %4 : vector<32x128xf32>
    %c0_5 = arith.constant 0 : index
    %c0_6 = arith.constant 0 : index
    %6 = vector.load %arg4[%c0_5, %c0_6] : memref<32x128xf32, #tpu.memory_space<vmem>>, vector<32x128xf32>
    tpu.vector_store %arg4[%c0_5, %c0_6], %5 {strides = array<i32>} : memref<32x128xf32, #tpu.memory_space<vmem>>, vector<32x128xf32>,
    return
  }
  func.func @transform_0(%arg0: i32) -> (i32, i32) {
    %c0_i32 = arith.constant 0 : i32
    %c0_i32_0 = arith.constant 0 : i32
    return %arg0, %c0_i32 : i32, i32
  }
  func.func @transform_1(%arg0: i32) -> (i32, i32) {
    %c0_i32 = arith.constant 0 : i32
    %c0_i32_0 = arith.constant 0 : i32
    %c0_i32_1 = arith.constant 0 : i32
    return %c0_i32, %c0_i32_0 : i32, i32
  }
  func.func @transform_2(%arg0: i32) -> (i32, i32) {
    %c0_i32 = arith.constant 0 : i32
    %c0_i32_0 = arith.constant 0 : i32
    %c0_i32_1 = arith.constant 0 : i32
    return %c0_i32, %c0_i32_0 : i32, i32
  }
  func.func @transform_3(%arg0: i32) -> (i32, i32) {
    %c0_i32 = arith.constant 0 : i32
    %c0_i32_0 = arith.constant 0 : i32
    return %arg0, %c0_i32 : i32, i32
  }
}

module attributes {stable_mosaic.version = 11 : i64} {
  func.func @_patch_embed_kernel(%arg0: i32, %arg1: memref<32x128xf32, #tpu.memory_space<vmem>>, %arg2: memref<128x128xf32, #tpu.memory_space<vmem>>, %arg3: memref<1x128xf32, #tpu.memory_space<vmem>>, %arg4: memref<32x128xf32, #tpu.memory_space<vmem>>) attributes {dimension_semantics = [#tpu.dimension_semantics<parallel>], iteration_bounds = array<i64: 1>, scalar_prefetch = 0 : i64, scratch_operands = 0 : i64, tpu.core_type = #tpu.core_type<tc>, window_params = [{transform_indices = @transform_0, window_bounds = array<i64: 32, 128>}, {pipeline_mode = #tpu.pipeline_mode<synchronous>, transform_indices = @transform_1, window_bounds = array<i64: 128, 128>}, {pipeline_mode = #tpu.pipeline_mode<synchronous>, transform_indices = @transform_2, window_bounds = array<i64: 1, 128>}, {transform_indices = @transform_3, window_bounds = array<i64: 32, 128>}]} {
    %c0 = arith.constant 0 : index
    %c0_0 = arith.constant 0 : index
    %0 = vector.load %arg1[%c0, %c0_0] : memref<32x128xf32, #tpu.memory_space<vmem>>, vector<32x128xf32>
    %c0_1 = arith.constant 0 : index
    %c0_2 = arith.constant 0 : index
    %1 = vector.load %arg2[%c0_1, %c0_2] : memref<128x128xf32, #tpu.memory_space<vmem>>, vector<128x128xf32>
    %cst = arith.constant dense<0.000000e+00> : vector<32x128xf32>
    %2 = tpu.matmul %0, %1, %cst {dimension_numbers = #tpu.dot_dimension_numbers<[1], [0], [0], [1], [0, 0, 1, 1], [], []>} : vector<32x128xf32>, vector<128x128xf32>, vector<32x128xf32> -> vector<32x128xf32>
    %c0_3 = arith.constant 0 : index
    %c0_4 = arith.constant 0 : index
    %3 = vector.load %arg3[%c0_3, %c0_4] : memref<1x128xf32, #tpu.memory_space<vmem>>, vector<1x128xf32>
    %4 = vector.broadcast %3 : vector<1x128xf32> to vector<32x128xf32>
    %5 = arith.addf %2, %4 : vector<32x128xf32>
    %c0_5 = arith.constant 0 : index
    %c0_6 = arith.constant 0 : index
    %6 = vector.load %arg4[%c0_5, %c0_6] : memref<32x128xf32, #tpu.memory_space<vmem>>, vector<32x128xf32>
    tpu.vector_store %arg4[%c0_5, %c0_6], %5 {strides = array<i32>} : memref<32x128xf32, #tpu.memory_space<vmem>>, vector<32x128xf32>,
    return
  }
  func.func @transform_0(%arg0: i32) -> (i32, i32) {
    %c0_i32 = arith.constant 0 : i32
    %c0_i32_0 = arith.constant 0 : i32
    return %arg0, %c0_i32 : i32, i32
  }
  func.func @transform_1(%arg0: i32) -> (i32, i32) {
    %c0_i32 = arith.constant 0 : i32
    %c0_i32_0 = arith.constant 0 : i32
    %c0_i32_1 = arith.constant 0 : i32
    return %c0_i32, %c0_i32_0 : i32, i32
  }
  func.func @transform_2(%arg0: i32) -> (i32, i32) {
    %c0_i32 = arith.constant 0 : i32
    %c0_i32_0 = arith.constant 0 : i32
    %c0_i32_1 = arith.constant 0 : i32
    return %c0_i32, %c0_i32_0 : i32, i32
  }
  func.func @transform_3(%arg0: i32) -> (i32, i32) {
    %c0_i32 = arith.constant 0 : i32
    %c0_i32_0 = arith.constant 0 : i32
    return %arg0, %c0_i32 : i32, i32
  }
}

</mosaic_0001>

<llo_original>
// kernel: tpu_custom_call.1
$region0: #{tpu_custom_call.1}
  #allocation0 [shape = 'u32[]', space=smem, size = 0x4, offset = 0x4, fixed_abs, tag = 'smem constant byte address 0x4 - core index']
  #allocation1 [shape = 'u32[144,128]{1,0:T(1,128)}', space=vmem, size = 0x12000, scoped, tag = 'internal scratch']
  %s0 = inlined_call_operand.hbm [shape: f32[32,128], index: 0, kind: input, shape index: {}]
  %s1 = inlined_call_operand.hbm [shape: f32[128,128], index: 1, kind: input, shape index: {}]
  %s2 = inlined_call_operand.vmem [shape: f32[1,128], index: 2, kind: input, shape index: {}]
  %s3 = inlined_call_operand.hbm [shape: f32[32,128], index: 3, kind: output, shape index: {}]
  %s4 = sld [smem:[#allocation0]]
  $region30: #{tpu_custom_call.1} parent=0
    _
  %s6 = ssub.s32 1, %s4
  %s7 = scalar_select 0, %s6, %s4
  $region1: #{tpu_custom_call.1} parent=0
    #allocation2 [shape = 'u8[16384]{0}', space=vmem, size = 0x4000, scoped, tag = 'input window, operand 0, single buffered']
    #allocation3 [shape = 's32[1]{0}', space=sflag, size = 0x4, scoped, tag = 'scoped memory for tpu_custom_call.1']
    #allocation4 [shape = 's32[1]{0}', space=sflag, size = 0x4, scoped, tag = 'scoped memory for tpu_custom_call.1']
    #allocation5 [shape = 'u8[65536]{0}', space=vmem, size = 0x10000, scoped, tag = 'input window, operand 1, single buffered']
    #allocation6 [shape = 's32[1]{0}', space=sflag, size = 0x4, scoped, tag = 'scoped memory for tpu_custom_call.1']
    #allocation7 [shape = 'u8[16384]{0}', space=vmem, size = 0x4000, scoped, tag = 'output window, operand 0, single buffered']
    %8 = vsyncpa [#allocation3], 0
    %9 = vsyncpa [#allocation6], 0
    %10 = vsyncpa [#allocation4], 0
    // Predicated region
    $region2: #{tpu_custom_call.1} parent=1 // pred_check
      _
    $region3: #{tpu_custom_call.1} parent=1 // pred_check_branch
      %12 = sbr.rel (0) target = $region5
    $region4: #{tpu_custom_call.1} parent=1 // pred_region
      %s14 = ssub.s32 512, 512
      %15 = vsyncadd [#allocation3], %s14
      %s16 = sshll.u32 [#allocation2], 4
      %s17 = int_to_ptr.vmem [resolvable:$true] %s16
      %22 = dma.hbm_to_vmem [thread:$0]  %s0, 512, %s17, [#allocation3], 128, 128, 8
    $region5: #{tpu_custom_call.1} parent=1 // pred_fallthru
      _
    // Predicated region
    $region6: #{tpu_custom_call.1} parent=1 // pred_check
      _
    $region7: #{tpu_custom_call.1} parent=1 // pred_check_branch
      %24 = sbr.rel (0) target = $region9
    $region8: #{tpu_custom_call.1} parent=1 // pred_region
      %s26 = ssub.s32 2048, 2048
      %27 = vsyncadd [#allocation6], %s26
      %s28 = sshll.u32 [#allocation5], 4
      %s29 = int_to_ptr.vmem [resolvable:$true] %s28
      %34 = dma.hbm_to_vmem [thread:$0]  %s1, 2048, %s29, [#allocation6], 128, 128, 8
    $region9: #{tpu_custom_call.1} parent=1 // pred_fallthru
      _
    // Predicated region
    $region10: #{tpu_custom_call.1} parent=1 // pred_check
      _
    $region11: #{tpu_custom_call.1} parent=1 // pred_check_branch
      %36 = sbr.rel (0) target = $region13
    $region12: #{tpu_custom_call.1} parent=1 // pred_region
      _
    $region13: #{tpu_custom_call.1} parent=1 // pred_fallthru
      _
    // Predicated region
    $region14: #{tpu_custom_call.1} parent=1 // pred_check
      _
    $region15: #{tpu_custom_call.1} parent=1 // pred_check_branch
      %38 = sbr.rel (0) target = $region17
    $region16: #{tpu_custom_call.1} parent=1 // pred_region
      %39 = dma.done [#allocation3], 512
    $region17: #{tpu_custom_call.1} parent=1 // pred_fallthru
      _
    // Predicated region
    $region18: #{tpu_custom_call.1} parent=1 // pred_check
      _
    $region19: #{tpu_custom_call.1} parent=1 // pred_check_branch
      %41 = sbr.rel (0) target = $region21
    $region20: #{tpu_custom_call.1} parent=1 // pred_region
      %42 = dma.done [#allocation6], 2048
    $region21: #{tpu_custom_call.1} parent=1 // pred_fallthru
      _
    %v43 = vld [vmem:[#allocation2] sm:$0xff]
    %v44 = vld [vmem:[#allocation2 + $0x8] sm:$0xff]
    %v45 = vld [vmem:[#allocation2 + $0x10] sm:$0xff]
    %v46 = vld [vmem:[#allocation2 + $0x18] sm:$0xff]
    %v47 = vld [vmem:[#allocation5] sm:$0xff]
    %v48 = vld [vmem:[#allocation5 + $0x8] sm:$0xff]
    %v49 = vld [vmem:[#allocation5 + $0x10] sm:$0xff]
    %v50 = vld [vmem:[#allocation5 + $0x18] sm:$0xff]
    %v51 = vld [vmem:[#allocation5 + $0x20] sm:$0xff]
    %v52 = vld [vmem:[#allocation5 + $0x28] sm:$0xff]
    %v53 = vld [vmem:[#allocation5 + $0x30] sm:$0xff]
    %v54 = vld [vmem:[#allocation5 + $0x38] sm:$0xff]
    %v55 = vld [vmem:[#allocation5 + $0x40] sm:$0xff]
    %v56 = vld [vmem:[#allocation5 + $0x48] sm:$0xff]
    %v57 = vld [vmem:[#allocation5 + $0x50] sm:$0xff]
    %v58 = vld [vmem:[#allocation5 + $0x58] sm:$0xff]
    %v59 = vld [vmem:[#allocation5 + $0x60] sm:$0xff]
    %v60 = vld [vmem:[#allocation5 + $0x68] sm:$0xff]
    %v61 = vld [vmem:[#allocation5 + $0x70] sm:$0xff]
    %v62 = vld [vmem:[#allocation5 + $0x78] sm:$0xff]
    %v63 = vld [vmem:[%s2] sm:$0x1]
    %v65 = vlaneseq
    %v66 = vshrl.u32 %v65, 7
    %v67 = vsub.s32 0, %v66
    %v68 = vrot.slane %v63, %v67
    %70 = vmatprep.subr.mxu0 0.0
    %71 = vmatpush1.msra.mxu0 %v62
    %72 = vmatprep.subr.mxu0 0.0
    %73 = vmatpush1.msra.mxu0 %v61
    %74 = vmatprep.subr.mxu0 0.0
    %75 = vmatpush1.msra.mxu0 %v60
    %76 = vmatprep.subr.mxu0 0.0
    %77 = vmatpush1.msra.mxu0 %v59
    %78 = vmatprep.subr.mxu0 0.0
    %79 = vmatpush1.msra.mxu0 %v58
    %80 = vmatprep.subr.mxu0 0.0
    %81 = vmatpush1.msra.mxu0 %v57
    %82 = vmatprep.subr.mxu0 0.0
    %83 = vmatpush1.msra.mxu0 %v56
    %84 = vmatprep.subr.mxu0 0.0
    %85 = vmatpush1.msra.mxu0 %v55
    %86 = vmatprep.subr.mxu0 0.0
    %87 = vmatpush1.msra.mxu0 %v54
    %88 = vmatprep.subr.mxu0 0.0
    %89 = vmatpush1.msra.mxu0 %v53
    %90 = vmatprep.subr.mxu0 0.0
    %91 = vmatpush1.msra.mxu0 %v52
    %92 = vmatprep.subr.mxu0 0.0
    %93 = vmatpush1.msra.mxu0 %v51
    %94 = vmatprep.subr.mxu0 0.0
    %95 = vmatpush1.msra.mxu0 %v50
    %96 = vmatprep.subr.mxu0 0.0
    %97 = vmatpush1.msra.mxu0 %v49
    %98 = vmatprep.subr.mxu0 0.0
    %99 = vmatpush1.msra.mxu0 %v48
    %100 = vmatprep.subr.mxu0 0.0
    %101 = vmatpush1.msra.mxu0 %v47
    %102 = vmatprep.subr.mxu0 0.0
    %103 = vmatpush2.msra.mxu0 0.0
    %104 = vmatprep.subr.mxu0 0.0
    %105 = vmatpush2.msra.mxu0 0.0
    %106 = vmatprep.subr.mxu0 0.0
    %107 = vmatpush2.msra.mxu0 0.0
    %108 = vmatprep.subr.mxu0 0.0
    %109 = vmatpush2.msra.mxu0 0.0
    %110 = vmatprep.subr.mxu0 0.0
    %111 = vmatpush2.msra.mxu0 0.0
    %112 = vmatprep.subr.mxu0 0.0
    %113 = vmatpush2.msra.mxu0 0.0
    %114 = vmatprep.subr.mxu0 0.0
    %115 = vmatpush2.msra.mxu0 0.0
    %116 = vmatprep.subr.mxu0 0.0
    %117 = vmatpush2.msra.mxu0 0.0
    %118 = vmatprep.subr.mxu0 0.0
    %119 = vmatpush2.msra.mxu0 0.0
    %120 = vmatprep.subr.mxu0 0.0
    %121 = vmatpush2.msra.mxu0 0.0
    %122 = vmatprep.subr.mxu0 0.0
    %123 = vmatpush2.msra.mxu0 0.0
    %124 = vmatprep.subr.mxu0 0.0
    %125 = vmatpush2.msra.mxu0 0.0
    %126 = vmatprep.subr.mxu0 0.0
    %127 = vmatpush2.msra.mxu0 0.0
    %128 = vmatprep.subr.mxu0 0.0
    %129 = vmatpush2.msra.mxu0 0.0
    %130 = vmatprep.subr.mxu0 0.0
    %131 = vmatpush2.msra.mxu0 0.0
    %132 = vmatprep.subr.mxu0 0.0
    %133 = vmatpush2.msra.mxu0 0.0
    %134 = vmatprep.mubr.f32.mxu0 0.0
    %135 = vmatmul.mubr.f32.gmra.mxu0 %v43
    %v136 = vpop.f32.mrf.mxu0
    %v137 = vadd.f32 %v68, %v136
    %v138 = vpop.f32.mrf.mxu0
    %139 = vmatprep.mubr.f32.mxu0 0.0
    %140 = vmatmul.mubr.f32.gmra.mxu0 %v44
    %v141 = vpop.f32.mrf.mxu0
    %v142 = vadd.f32 %v68, %v141
    %v143 = vpop.f32.mrf.mxu0
    %144 = vmatprep.mubr.f32.mxu0 0.0
    %145 = vmatmul.mubr.f32.gmra.mxu0 %v45
    %v146 = vpop.f32.mrf.mxu0
    %v147 = vadd.f32 %v68, %v146
    %v148 = vpop.f32.mrf.mxu0
    %149 = vmatprep.mubr.f32.mxu0 0.0
    %150 = vmatmul.mubr.f32.gmra.mxu0 %v46
    %v151 = vpop.f32.mrf.mxu0
    %v152 = vadd.f32 %v68, %v151
    %v153 = vpop.f32.mrf.mxu0
    %154 = vdwg.mxu0
    %155 = vst [vmem:[#allocation7] sm:$0xff] %v137
    %156 = vst [vmem:[#allocation7 + $0x8] sm:$0xff] %v142
    %157 = vst [vmem:[#allocation7 + $0x10] sm:$0xff] %v147
    %158 = vst [vmem:[#allocation7 + $0x18] sm:$0xff] %v152
    // Predicated region
    $region22: #{tpu_custom_call.1} parent=1 // pred_check
      _
    $region23: #{tpu_custom_call.1} parent=1 // pred_check_branch
      %160 = sbr.rel (0) target = $region25
    $region24: #{tpu_custom_call.1} parent=1 // pred_region
      %s162 = ssub.s32 512, 512
      %163 = vsyncadd [#allocation4], %s162
      %s164 = sshll.u32 [#allocation7], 4
      %s165 = int_to_ptr.vmem [resolvable:$true] %s164
      %170 = dma.vmem_to_hbm [thread:$0]  %s165, 512, %s3, [#allocation4], 128, 128, 8
    $region25: #{tpu_custom_call.1} parent=1 // pred_fallthru
      _
    // Predicated region
    $region26: #{tpu_custom_call.1} parent=1 // pred_check
      _
    $region27: #{tpu_custom_call.1} parent=1 // pred_check_branch
      %172 = sbr.rel (0) target = $region29
    $region28: #{tpu_custom_call.1} parent=1 // pred_region
      %173 = dma.done [#allocation4], 512
    $region29: #{tpu_custom_call.1} parent=1 // pred_fallthru
      _
    %174 = vsyncpa [#allocation3], 1
    %175 = vsyncpa [#allocation6], 1
    %176 = vsyncpa [#allocation4], 1

// kernel: tpu_custom_call.1
$region0: #{tpu_custom_call.1}
  #allocation0 [shape = 'u32[]', space=smem, size = 0x4, offset = 0x4, fixed_abs, tag = 'smem constant byte address 0x4 - core index']
  #allocation1 [shape = 'u32[144,128]{1,0:T(1,128)}', space=vmem, size = 0x12000, scoped, tag = 'internal scratch']
  %s0 = inlined_call_operand.hbm [shape: f32[32,128], index: 0, kind: input, shape index: {}]
  %s1 = inlined_call_operand.hbm [shape: f32[128,128], index: 1, kind: input, shape index: {}]
  %s2 = inlined_call_operand.vmem [shape: f32[1,128], index: 2, kind: input, shape index: {}]
  %s3 = inlined_call_operand.hbm [shape: f32[32,128], index: 3, kind: output, shape index: {}]
  %s4 = sld [smem:[#allocation0]]
  $region30: #{tpu_custom_call.1} parent=0
    _
  %s6 = ssub.s32 1, %s4
  %s7 = scalar_select 0, %s6, %s4
  $region1: #{tpu_custom_call.1} parent=0
    #allocation2 [shape = 'u8[16384]{0}', space=vmem, size = 0x4000, scoped, tag = 'input window, operand 0, single buffered']
    #allocation3 [shape = 's32[1]{0}', space=sflag, size = 0x4, scoped, tag = 'scoped memory for tpu_custom_call.1']
    #allocation4 [shape = 's32[1]{0}', space=sflag, size = 0x4, scoped, tag = 'scoped memory for tpu_custom_call.1']
    #allocation5 [shape = 'u8[65536]{0}', space=vmem, size = 0x10000, scoped, tag = 'input window, operand 1, single buffered']
    #allocation6 [shape = 's32[1]{0}', space=sflag, size = 0x4, scoped, tag = 'scoped memory for tpu_custom_call.1']
    #allocation7 [shape = 'u8[16384]{0}', space=vmem, size = 0x4000, scoped, tag = 'output window, operand 0, single buffered']
    %8 = vsyncpa [#allocation3], 0
    %9 = vsyncpa [#allocation6], 0
    %10 = vsyncpa [#allocation4], 0
    // Predicated region
    $region2: #{tpu_custom_call.1} parent=1 // pred_check
      _
    $region3: #{tpu_custom_call.1} parent=1 // pred_check_branch
      %12 = sbr.rel (0) target = $region5
    $region4: #{tpu_custom_call.1} parent=1 // pred_region
      %s14 = ssub.s32 512, 512
      %15 = vsyncadd [#allocation3], %s14
      %s16 = sshll.u32 [#allocation2], 4
      %s17 = int_to_ptr.vmem [resolvable:$true] %s16
      %22 = dma.hbm_to_vmem [thread:$0]  %s0, 512, %s17, [#allocation3], 128, 128, 8
    $region5: #{tpu_custom_call.1} parent=1 // pred_fallthru
      _
    // Predicated region
    $region6: #{tpu_custom_call.1} parent=1 // pred_check
      _
    $region7: #{tpu_custom_call.1} parent=1 // pred_check_branch
      %24 = sbr.rel (0) target = $region9
    $region8: #{tpu_custom_call.1} parent=1 // pred_region
      %s26 = ssub.s32 2048, 2048
      %27 = vsyncadd [#allocation6], %s26
      %s28 = sshll.u32 [#allocation5], 4
      %s29 = int_to_ptr.vmem [resolvable:$true] %s28
      %34 = dma.hbm_to_vmem [thread:$0]  %s1, 2048, %s29, [#allocation6], 128, 128, 8
    $region9: #{tpu_custom_call.1} parent=1 // pred_fallthru
      _
    // Predicated region
    $region10: #{tpu_custom_call.1} parent=1 // pred_check
      _
    $region11: #{tpu_custom_call.1} parent=1 // pred_check_branch
      %36 = sbr.rel (0) target = $region13
    $region12: #{tpu_custom_call.1} parent=1 // pred_region
      _
    $region13: #{tpu_custom_call.1} parent=1 // pred_fallthru
      _
    // Predicated region
    $region14: #{tpu_custom_call.1} parent=1 // pred_check
      _
    $region15: #{tpu_custom_call.1} parent=1 // pred_check_branch
      %38 = sbr.rel (0) target = $region17
    $region16: #{tpu_custom_call.1} parent=1 // pred_region
      %39 = dma.done [#allocation3], 512
    $region17: #{tpu_custom_call.1} parent=1 // pred_fallthru
      _
    // Predicated region
    $region18: #{tpu_custom_call.1} parent=1 // pred_check
      _
    $region19: #{tpu_custom_call.1} parent=1 // pred_check_branch
      %41 = sbr.rel (0) target = $region21
    $region20: #{tpu_custom_call.1} parent=1 // pred_region
      %42 = dma.done [#allocation6], 2048
    $region21: #{tpu_custom_call.1} parent=1 // pred_fallthru
      _
    %v43 = vld [vmem:[#allocation2] sm:$0xff]
    %v44 = vld [vmem:[#allocation2 + $0x8] sm:$0xff]
    %v45 = vld [vmem:[#allocation2 + $0x10] sm:$0xff]
    %v46 = vld [vmem:[#allocation2 + $0x18] sm:$0xff]
    %v47 = vld [vmem:[#allocation5] sm:$0xff]
    %v48 = vld [vmem:[#allocation5 + $0x8] sm:$0xff]
    %v49 = vld [vmem:[#allocation5 + $0x10] sm:$0xff]
    %v50 = vld [vmem:[#allocation5 + $0x18] sm:$0xff]
    %v51 = vld [vmem:[#allocation5 + $0x20] sm:$0xff]
    %v52 = vld [vmem:[#allocation5 + $0x28] sm:$0xff]
    %v53 = vld [vmem:[#allocation5 + $0x30] sm:$0xff]
    %v54 = vld [vmem:[#allocation5 + $0x38] sm:$0xff]
    %v55 = vld [vmem:[#allocation5 + $0x40] sm:$0xff]
    %v56 = vld [vmem:[#allocation5 + $0x48] sm:$0xff]
    %v57 = vld [vmem:[#allocation5 + $0x50] sm:$0xff]
    %v58 = vld [vmem:[#allocation5 + $0x58] sm:$0xff]
    %v59 = vld [vmem:[#allocation5 + $0x60] sm:$0xff]
    %v60 = vld [vmem:[#allocation5 + $0x68] sm:$0xff]
    %v61 = vld [vmem:[#allocation5 + $0x70] sm:$0xff]
    %v62 = vld [vmem:[#allocation5 + $0x78] sm:$0xff]
    %v63 = vld [vmem:[%s2] sm:$0x1]
    %v65 = vlaneseq
    %v66 = vshrl.u32 %v65, 7
    %v67 = vsub.s32 0, %v66
    %v68 = vrot.slane %v63, %v67
    %70 = vmatprep.subr.mxu0 0.0
    %71 = vmatpush1.msra.mxu0 %v62
    %72 = vmatprep.subr.mxu0 0.0
    %73 = vmatpush1.msra.mxu0 %v61
    %74 = vmatprep.subr.mxu0 0.0
    %75 = vmatpush1.msra.mxu0 %v60
    %76 = vmatprep.subr.mxu0 0.0
    %77 = vmatpush1.msra.mxu0 %v59
    %78 = vmatprep.subr.mxu0 0.0
    %79 = vmatpush1.msra.mxu0 %v58
    %80 = vmatprep.subr.mxu0 0.0
    %81 = vmatpush1.msra.mxu0 %v57
    %82 = vmatprep.subr.mxu0 0.0
    %83 = vmatpush1.msra.mxu0 %v56
    %84 = vmatprep.subr.mxu0 0.0
    %85 = vmatpush1.msra.mxu0 %v55
    %86 = vmatprep.subr.mxu0 0.0
    %87 = vmatpush1.msra.mxu0 %v54
    %88 = vmatprep.subr.mxu0 0.0
    %89 = vmatpush1.msra.mxu0 %v53
    %90 = vmatprep.subr.mxu0 0.0
    %91 = vmatpush1.msra.mxu0 %v52
    %92 = vmatprep.subr.mxu0 0.0
    %93 = vmatpush1.msra.mxu0 %v51
    %94 = vmatprep.subr.mxu0 0.0
    %95 = vmatpush1.msra.mxu0 %v50
    %96 = vmatprep.subr.mxu0 0.0
    %97 = vmatpush1.msra.mxu0 %v49
    %98 = vmatprep.subr.mxu0 0.0
    %99 = vmatpush1.msra.mxu0 %v48
    %100 = vmatprep.subr.mxu0 0.0
    %101 = vmatpush1.msra.mxu0 %v47
    %102 = vmatprep.subr.mxu0 0.0
    %103 = vmatpush2.msra.mxu0 0.0
    %104 = vmatprep.subr.mxu0 0.0
    %105 = vmatpush2.msra.mxu0 0.0
    %106 = vmatprep.subr.mxu0 0.0
    %107 = vmatpush2.msra.mxu0 0.0
    %108 = vmatprep.subr.mxu0 0.0
    %109 = vmatpush2.msra.mxu0 0.0
    %110 = vmatprep.subr.mxu0 0.0
    %111 = vmatpush2.msra.mxu0 0.0
    %112 = vmatprep.subr.mxu0 0.0
    %113 = vmatpush2.msra.mxu0 0.0
    %114 = vmatprep.subr.mxu0 0.0
    %115 = vmatpush2.msra.mxu0 0.0
    %116 = vmatprep.subr.mxu0 0.0
    %117 = vmatpush2.msra.mxu0 0.0
    %118 = vmatprep.subr.mxu0 0.0
    %119 = vmatpush2.msra.mxu0 0.0
    %120 = vmatprep.subr.mxu0 0.0
    %121 = vmatpush2.msra.mxu0 0.0
    %122 = vmatprep.subr.mxu0 0.0
    %123 = vmatpush2.msra.mxu0 0.0
    %124 = vmatprep.subr.mxu0 0.0
    %125 = vmatpush2.msra.mxu0 0.0
    %126 = vmatprep.subr.mxu0 0.0
    %127 = vmatpush2.msra.mxu0 0.0
    %128 = vmatprep.subr.mxu0 0.0
    %129 = vmatpush2.msra.mxu0 0.0
    %130 = vmatprep.subr.mxu0 0.0
    %131 = vmatpush2.msra.mxu0 0.0
    %132 = vmatprep.subr.mxu0 0.0
    %133 = vmatpush2.msra.mxu0 0.0
    %134 = vmatprep.mubr.f32.mxu0 0.0
    %135 = vmatmul.mubr.f32.gmra.mxu0 %v43
    %v136 = vpop.f32.mrf.mxu0
    %v137 = vadd.f32 %v68, %v136
    %v138 = vpop.f32.mrf.mxu0
    %139 = vmatprep.mubr.f32.mxu0 0.0
    %140 = vmatmul.mubr.f32.gmra.mxu0 %v44
    %v141 = vpop.f32.mrf.mxu0
    %v142 = vadd.f32 %v68, %v141
    %v143 = vpop.f32.mrf.mxu0
    %144 = vmatprep.mubr.f32.mxu0 0.0
    %145 = vmatmul.mubr.f32.gmra.mxu0 %v45
    %v146 = vpop.f32.mrf.mxu0
    %v147 = vadd.f32 %v68, %v146
    %v148 = vpop.f32.mrf.mxu0
    %149 = vmatprep.mubr.f32.mxu0 0.0
    %150 = vmatmul.mubr.f32.gmra.mxu0 %v46
    %v151 = vpop.f32.mrf.mxu0
    %v152 = vadd.f32 %v68, %v151
    %v153 = vpop.f32.mrf.mxu0
    %154 = vdwg.mxu0
    %155 = vst [vmem:[#allocation7] sm:$0xff] %v137
    %156 = vst [vmem:[#allocation7 + $0x8] sm:$0xff] %v142
    %157 = vst [vmem:[#allocation7 + $0x10] sm:$0xff] %v147
    %158 = vst [vmem:[#allocation7 + $0x18] sm:$0xff] %v152
    // Predicated region
    $region22: #{tpu_custom_call.1} parent=1 // pred_check
      _
    $region23: #{tpu_custom_call.1} parent=1 // pred_check_branch
      %160 = sbr.rel (0) target = $region25
    $region24: #{tpu_custom_call.1} parent=1 // pred_region
      %s162 = ssub.s32 512, 512
      %163 = vsyncadd [#allocation4], %s162
      %s164 = sshll.u32 [#allocation7], 4
      %s165 = int_to_ptr.vmem [resolvable:$true] %s164
      %170 = dma.vmem_to_hbm [thread:$0]  %s165, 512, %s3, [#allocation4], 128, 128, 8
    $region25: #{tpu_custom_call.1} parent=1 // pred_fallthru
      _
    // Predicated region
    $region26: #{tpu_custom_call.1} parent=1 // pred_check
      _
    $region27: #{tpu_custom_call.1} parent=1 // pred_check_branch
      %172 = sbr.rel (0) target = $region29
    $region28: #{tpu_custom_call.1} parent=1 // pred_region
      %173 = dma.done [#allocation4], 512
    $region29: #{tpu_custom_call.1} parent=1 // pred_fallthru
      _
    %174 = vsyncpa [#allocation3], 1
    %175 = vsyncpa [#allocation6], 1
    %176 = vsyncpa [#allocation4], 1

</llo_original>
